<compile_context>
chip_gen: v5e
topology: v5e:2x2
jax: 0.10.0
libtpu: 0.0.40
codegen_flags: <defaults>
</compile_context>

<pallas_src>
import jax
import jax.numpy as jnp
import numpy as np
from jax.experimental import pallas as pl
from jax.experimental.pallas import tpu as pltpu


def _identity_dma_kernel(x_hbm, o_hbm, sem):
    # Whole forward pass of MyModel is `return x`; as a kernel that is a single
    # whole-array HBM->HBM DMA. No VMEM staging, no grid, no masked stores.
    cp = pltpu.make_async_copy(x_hbm, o_hbm, sem)
    cp.start()
    cp.wait()


def _identity_pallas(x):
    """Identity as a Pallas TPU kernel: one HBM->HBM DMA of the full array."""
    return pl.pallas_call(
        _identity_dma_kernel,
        out_shape=jax.ShapeDtypeStruct(x.shape, x.dtype),
        in_specs=[pl.BlockSpec(memory_space=pl.ANY)],
        out_specs=pl.BlockSpec(memory_space=pl.ANY),
        scratch_shapes=[pltpu.SemaphoreType.DMA(())],
    )(x)


def my_model_forward(x, use_pallas_kernel=False):
    """Forward pass of MyModel.

    Default path is the review-recommended no-op (`return x`): zero HBM traffic,
    zero kernel launch overhead. Set use_pallas_kernel=True to route the copy
    through the Pallas HBM->HBM DMA kernel instead.
    """
    if not use_pallas_kernel:
        return x
    return _identity_pallas(x)


class MyModelPallas:
    """JAX/Pallas port of the PyTorch MyModel.

    The PyTorch __init__ takes (input_dim, hidden_dim, output_dim, num_layers)
    but creates no parameters, and forward(x) returns x unchanged.
    """

    def __init__(self, input_dim, hidden_dim, output_dim, num_layers):
        self.input_dim = input_dim
        self.hidden_dim = hidden_dim
        self.output_dim = output_dim
        self.num_layers = num_layers

    def __call__(self, x, use_pallas_kernel=False):
        return my_model_forward(x, use_pallas_kernel=use_pallas_kernel)

    def print_parameters(self):
        # Reference module defines zero parameters.
        print("num_parameters:", 0)


if __name__ == "__main__":
    key = jax.random.PRNGKey(0)
    batch, input_dim, hidden_dim, output_dim, num_layers = 8, 32, 64, 16, 2

    x = jax.random.normal(key, (batch, input_dim), dtype=jnp.float32)
    x_ref = np.asarray(jax.device_get(x))  # reference copy taken before any call

    model = MyModelPallas(input_dim, hidden_dim, output_dim, num_layers)

    # Fast path (recommended): identity, no kernel launched at all.
    y_fast = jax.block_until_ready(model(x))
    assert y_fast.shape == x_ref.shape and y_fast.dtype == x_ref.dtype
    assert np.array_equal(np.asarray(jax.device_get(y_fast)), x_ref)

    # Pallas path: exercised here so the kernel compiles and runs on TPU.
    y_kernel = jax.block_until_ready(model(x, use_pallas_kernel=True))
    assert y_kernel.shape == x_ref.shape and y_kernel.dtype == x_ref.dtype
    assert np.array_equal(np.asarray(jax.device_get(y_kernel)), x_ref)

    print("KERNEL_OK")
</pallas_src>

<mosaic_0001>
module attributes {stable_mosaic.version = 11 : i64} {
  func.func @_identity_dma_kernel(%arg0: memref<8x32xf32, #tpu.memory_space<any>>, %arg1: memref<8x32xf32, #tpu.memory_space<any>>, %arg2: memref<!tpu.dma_semaphore, #tpu.memory_space<semaphore_mem>>) attributes {dimension_semantics = [], scalar_prefetch = 0 : i64, scratch_operands = 1 : i64, tpu.core_type = #tpu.core_type<tc>} {
    tpu.enqueue_dma source(%arg0 : memref<8x32xf32, #tpu.memory_space<any>>) target(%arg1 : memref<8x32xf32, #tpu.memory_space<any>>) target_semaphore(%arg2 : memref<!tpu.dma_semaphore, #tpu.memory_space<semaphore_mem>>)
    tpu.wait_dma2 semaphore(%arg2 : memref<!tpu.dma_semaphore, #tpu.memory_space<semaphore_mem>>) src(%arg0 : memref<8x32xf32, #tpu.memory_space<any>>) dst(%arg1 : memref<8x32xf32, #tpu.memory_space<any>>)
    return
  }
}

</mosaic_0001>

<llo_original>
// kernel: tpu_custom_call.1
$region0: #{tpu_custom_call.1}
  #allocation0 [shape = 'u32[]', space=smem, size = 0x4, offset = 0x4, fixed_abs, tag = 'smem constant byte address 0x4 - core index']
  #allocation1 [shape = 'u32[72,128]{1,0:T(1,128)}', space=vmem, size = 0x9000, scoped, tag = 'internal scratch']
  #allocation2 [shape = 's32[1]{0}', space=sflag, size = 0x4, scoped, tag = 'scratch operand']
  #allocation3 [shape = 's32[]', space=sflag, size = 0x4, offset = 0, fixed_abs, tag = 'sflag constant byte address 0x0 - dummy sync flag']
  #allocation4 [shape = 'u32[0]{0}', space=smem, size = 0, offset = 0, fixed_abs, tag = 'smem constant byte address 0x0 - null']
  %s0 = inlined_call_operand.hbm [shape: f32[8,32], index: 0, kind: input, shape index: {}]
  %s1 = inlined_call_operand.hbm [shape: f32[8,32], index: 1, kind: output, shape index: {}]
  %s2 = sld [smem:[#allocation0]]
  $region2: #{tpu_custom_call.1} parent=0
    _
  %s4 = ssub.s32 1, %s2
  %s5 = scalar_select 0, %s4, %s2
  %s7 = sshll.u32 1, 14
  %s8 = sxor.u32 4294967295, %s7
  %s10 = sshll.u32 %s0, 4
  %s11 = int_to_ptr.hbm [resolvable:$true] %s10
  %s12 = sshll.u32 %s1, 4
  %s13 = int_to_ptr.hbm [resolvable:$true] %s12
  %16 = dma.general %s11, 128, %s13, [#allocation2], [#allocation3], [#allocation4], 0, 0
  %s17 = smul.u32 8, 1
  %s18 = sshll.u32 %s17, 4
  %19 = dma.done [#allocation2], %s18
  %20 = vsyncmov [#allocation2]
  %s21 = vpop.sfrf %20
  %p22 = scmp.eq.s32.totalorder %s21, 0
  %p23 = pneg %p22
  %25 = shalt.err (%p23)

</llo_original>
